<compile_context>
chip_gen: v6e
topology: v6e:2x2x1
jax: 0.10.0
libtpu: 0.0.40
codegen_flags: <defaults>
</compile_context>

<pallas_src>
import jax
import jax.numpy as jnp
from jax.experimental import pallas as pl
from jax.experimental.pallas import tpu as pltpu


def _make_ressl_head_kernel(temperature: float):
    inv_t_k = 1.0 / float(temperature)   # teacher temperature (configurable, default 0.07)
    inv_t_q = 1.0 / 0.1                  # student temperature (hard-coded 0.1 in the module)

    def kernel(q_ref, k_ref, out_ref):
        # (TN, K) tiles; upcast + temperature scale in-kernel (cheap VPU work under DMA).
        q = q_ref[...].astype(jnp.float32) * inv_t_q
        k = k_ref[...].astype(jnp.float32) * inv_t_k

        # Teacher softmax statistics (no full-width normalization needed).
        k_max = jnp.max(k, axis=1, keepdims=True)
        k_exp = jnp.exp(k - k_max)
        k_sum = jnp.sum(k_exp, axis=1, keepdims=True)          # (TN, 1)

        # Student log-softmax statistics.
        q_max = jnp.max(q, axis=1, keepdims=True)
        q_shift = q - q_max
        q_lse = jnp.log(jnp.sum(jnp.exp(q_shift), axis=1, keepdims=True))  # (TN, 1)

        # -sum_j softmax(k)_j * log_softmax(q)_j
        #   = q_lse - sum_j(k_exp_j * q_shift_j) / k_sum       (since sum_j softmax(k)_j == 1)
        kq = jnp.sum(k_exp * q_shift, axis=1, keepdims=True)   # (TN, 1)
        per_row = q_lse - kq * pl.reciprocal(k_sum, approx=False)

        out_ref[...] = per_row.astype(out_ref.dtype)           # (TN, 1) per-sample losses

    return kernel


def _pick_batch_tile(n: int, k: int, itemsize: int):
    """Generation-aware batch tile: 2 inputs x 2 pipeline buffers within a VMEM budget."""
    try:
        vmem_bytes = int(pltpu.get_tpu_info().vmem_capacity_bytes)
    except Exception:
        vmem_bytes = 64 << 20  # conservative fallback (v7x-sized)
    budget = max(vmem_bytes // 4, 8 << 20)       # total bytes for the 4 input buffers
    tn = budget // (4 * k * itemsize)
    tn = int(max(tn, 1))
    if tn >= n:
        tn = n                                    # full-extent block (always legal)
    else:
        tn = max((tn // 8) * 8, 8)                # second-last block dim must be 8-aligned
    tile_bytes = 2 * 2 * tn * k * itemsize        # 2 inputs, double-buffered
    vmem_limit = int(min(max(2 * tile_bytes, 32 << 20), max(vmem_bytes // 2, 32 << 20)))
    return tn, vmem_limit


def dynamic_ressl_head_loss(logits_q, logits_k, temperature: float = 0.07):
    """Returns {'loss_contra': scalar}, matching DynamicResslHead.forward."""
    assert logits_q.shape == logits_k.shape and logits_q.ndim == 2
    n, k = logits_q.shape
    itemsize = jnp.dtype(logits_q.dtype).itemsize
    tn, vmem_limit = _pick_batch_tile(n, k, itemsize)
    num_tiles = pl.cdiv(n, tn)

    kernel = _make_ressl_head_kernel(temperature)

    per_sample = pl.pallas_call(
        kernel,
        out_shape=jax.ShapeDtypeStruct((n, 1), jnp.float32),
        grid_spec=pltpu.PrefetchScalarGridSpec(
            num_scalar_prefetch=0,
            grid=(num_tiles,),
            in_specs=[
                pl.BlockSpec((tn, k), lambda i: (i, 0)),
                pl.BlockSpec((tn, k), lambda i: (i, 0)),
            ],
            out_specs=pl.BlockSpec((tn, 1), lambda i: (i, 0)),
        ),
        compiler_params=pltpu.CompilerParams(
            dimension_semantics=("parallel",),     # independent tiles -> megacore on v7x
            vmem_limit_bytes=vmem_limit,
        ),
    )(logits_q, logits_k)

    # Tiny batch mean done in the wrapper (divides by the true N; ragged tiles are
    # harmless because out-of-range output rows are never written back).
    loss = jnp.mean(per_sample)
    return {"loss_contra": loss}


def _reference_loss(logits_q, logits_k, temperature=0.07):
    q = logits_q.astype(jnp.float32)
    kk = logits_k.astype(jnp.float32)
    k_soft = jax.nn.softmax(kk / temperature, axis=1)
    q_logsoft = jax.nn.log_softmax(q / 0.1, axis=1)
    return -jnp.sum(k_soft * q_logsoft, axis=1).mean()


if __name__ == "__main__":
    key = jax.random.PRNGKey(0)
    kq, kk = jax.random.split(key)

    # Small demo shapes: batch x num_prototypes.
    N, K = 64, 512
    logits_q = jax.random.normal(kq, (N, K), dtype=jnp.float32)
    logits_k = jax.random.normal(kk, (N, K), dtype=jnp.float32)

    # f32 inputs
    losses = dynamic_ressl_head_loss(logits_q, logits_k, temperature=0.07)
    loss = jax.block_until_ready(losses["loss_contra"])
    ref = _reference_loss(logits_q, logits_k, temperature=0.07)
    assert jnp.allclose(loss, ref, rtol=1e-5, atol=1e-5), (loss, ref)

    # bf16 inputs (recommended for production: halves HBM traffic; kernel upcasts to f32)
    q16 = logits_q.astype(jnp.bfloat16)
    k16 = logits_k.astype(jnp.bfloat16)
    losses16 = dynamic_ressl_head_loss(q16, k16, temperature=0.07)
    loss16 = jax.block_until_ready(losses16["loss_contra"])
    ref16 = _reference_loss(q16, k16, temperature=0.07)
    assert jnp.allclose(loss16, ref16, rtol=1e-4, atol=1e-4), (loss16, ref16)

    print("KERNEL_OK")
</pallas_src>

<mosaic_0001>
module attributes {stable_mosaic.version = 11 : i64} {
  func.func @kernel(%arg0: i32, %arg1: memref<64x512xf32, #tpu.memory_space<vmem>>, %arg2: memref<64x512xf32, #tpu.memory_space<vmem>>, %arg3: memref<64x1xf32, #tpu.memory_space<vmem>>) attributes {dimension_semantics = [#tpu.dimension_semantics<parallel>], iteration_bounds = array<i64: 1>, scalar_prefetch = 0 : i64, scratch_operands = 0 : i64, tpu.core_type = #tpu.core_type<tc>, window_params = [{transform_indices = @transform_0, window_bounds = array<i64: 64, 512>}, {transform_indices = @transform_1, window_bounds = array<i64: 64, 512>}, {transform_indices = @transform_2, window_bounds = array<i64: 64, 1>}]} {
    %c0 = arith.constant 0 : index
    %c0_0 = arith.constant 0 : index
    %0 = vector.load %arg1[%c0, %c0_0] : memref<64x512xf32, #tpu.memory_space<vmem>>, vector<64x512xf32>
    %cst = arith.constant 1.000000e+01 : f32
    %1 = vector.broadcast %cst : f32 to vector<64x512xf32>
    %2 = arith.mulf %0, %1 : vector<64x512xf32>
    %c0_1 = arith.constant 0 : index
    %c0_2 = arith.constant 0 : index
    %3 = vector.load %arg2[%c0_1, %c0_2] : memref<64x512xf32, #tpu.memory_space<vmem>>, vector<64x512xf32>
    %cst_3 = arith.constant 14.2857141 : f32
    %4 = vector.broadcast %cst_3 : f32 to vector<64x512xf32>
    %5 = arith.mulf %3, %4 : vector<64x512xf32>
    %cst_4 = arith.constant dense<0xFF800000> : vector<64xf32>
    %6 = vector.multi_reduction <maximumf>, %5, %cst_4 [1] : vector<64x512xf32> to vector<64xf32>
    %7 = vector.shape_cast %6 : vector<64xf32> to vector<64x1xf32>
    %8 = vector.broadcast %7 : vector<64x1xf32> to vector<64x512xf32>
    %9 = arith.subf %5, %8 : vector<64x512xf32>
    %10 = math.exp %9 : vector<64x512xf32>
    %cst_5 = arith.constant dense<0.000000e+00> : vector<64xf32>
    %11 = vector.multi_reduction <add>, %10, %cst_5 [1] : vector<64x512xf32> to vector<64xf32>
    %12 = vector.shape_cast %11 : vector<64xf32> to vector<64x1xf32>
    %cst_6 = arith.constant dense<0xFF800000> : vector<64xf32>
    %13 = vector.multi_reduction <maximumf>, %2, %cst_6 [1] : vector<64x512xf32> to vector<64xf32>
    %14 = vector.shape_cast %13 : vector<64xf32> to vector<64x1xf32>
    %15 = vector.broadcast %14 : vector<64x1xf32> to vector<64x512xf32>
    %16 = arith.subf %2, %15 : vector<64x512xf32>
    %17 = math.exp %16 : vector<64x512xf32>
    %cst_7 = arith.constant dense<0.000000e+00> : vector<64xf32>
    %18 = vector.multi_reduction <add>, %17, %cst_7 [1] : vector<64x512xf32> to vector<64xf32>
    %19 = vector.shape_cast %18 : vector<64xf32> to vector<64x1xf32>
    %20 = math.log %19 : vector<64x1xf32>
    %21 = arith.mulf %10, %16 : vector<64x512xf32>
    %cst_8 = arith.constant dense<0.000000e+00> : vector<64xf32>
    %22 = vector.multi_reduction <add>, %21, %cst_8 [1] : vector<64x512xf32> to vector<64xf32>
    %23 = vector.shape_cast %22 : vector<64xf32> to vector<64x1xf32>
    %24 = tpu.reciprocal %12 : vector<64x1xf32> -> vector<64x1xf32>
    %25 = arith.mulf %23, %24 : vector<64x1xf32>
    %26 = arith.subf %20, %25 : vector<64x1xf32>
    %c0_9 = arith.constant 0 : index
    %c0_10 = arith.constant 0 : index
    %27 = vector.load %arg3[%c0_9, %c0_10] : memref<64x1xf32, #tpu.memory_space<vmem>>, vector<64x1xf32>
    tpu.vector_store %arg3[%c0_9, %c0_10], %26 {strides = array<i32>} : memref<64x1xf32, #tpu.memory_space<vmem>>, vector<64x1xf32>,
    return
  }
  func.func @transform_0(%arg0: i32) -> (i32, i32) {
    %c0_i32 = arith.constant 0 : i32
    %c0_i32_0 = arith.constant 0 : i32
    return %arg0, %c0_i32 : i32, i32
  }
  func.func @transform_1(%arg0: i32) -> (i32, i32) {
    %c0_i32 = arith.constant 0 : i32
    %c0_i32_0 = arith.constant 0 : i32
    return %arg0, %c0_i32 : i32, i32
  }
  func.func @transform_2(%arg0: i32) -> (i32, i32) {
    %c0_i32 = arith.constant 0 : i32
    %c0_i32_0 = arith.constant 0 : i32
    return %arg0, %c0_i32 : i32, i32
  }
}

</mosaic_0001>

<llo_original>
// kernel: tpu_custom_call.1
$region0: #{tpu_custom_call.1}
  #allocation0 [shape = 'u32[]', space=smem, size = 0x4, offset = 0x4, fixed_abs, tag = 'smem constant byte address 0x4 - core index']
  #allocation1 [shape = 'u32[144,128]{1,0:T(1,128)}', space=vmem, size = 0x12000, scoped, tag = 'internal scratch']
  %s0 = inlined_call_operand.hbm [shape: f32[64,512], index: 0, kind: input, shape index: {}]
  %s1 = inlined_call_operand.hbm [shape: f32[64,512], index: 1, kind: input, shape index: {}]
  %s2 = inlined_call_operand.vmem [shape: f32[64,1], index: 2, kind: output, shape index: {}]
  %s3 = sld [smem:[#allocation0]]
  $region26: #{tpu_custom_call.1} parent=0
    _
  %s5 = ssub.s32 1, %s3
  %s6 = scalar_select 0, %s5, %s3
  $region1: #{tpu_custom_call.1} parent=0
    #allocation2 [shape = 'u8[131072]{0}', space=vmem, size = 0x20000, scoped, tag = 'input window, operand 0, single buffered']
    #allocation3 [shape = 's32[1]{0}', space=sflag, size = 0x4, scoped, tag = 'scoped memory for tpu_custom_call.1']
    #allocation4 [shape = 'u8[131072]{0}', space=vmem, size = 0x20000, scoped, tag = 'input window, operand 1, single buffered']
    #allocation5 [shape = 's32[1]{0}', space=sflag, size = 0x4, scoped, tag = 'scoped memory for tpu_custom_call.1']
    %7 = vsyncpa [#allocation3], 0
    %8 = vsyncpa [#allocation5], 0
    // Predicated region
    $region2: #{tpu_custom_call.1} parent=1 // pred_check
      _
    $region3: #{tpu_custom_call.1} parent=1 // pred_check_branch
      %10 = sbr.rel (0) target = $region5
    $region4: #{tpu_custom_call.1} parent=1 // pred_region
      %s12 = ssub.s32 4096, 4096
      %13 = vsyncadd [#allocation3], %s12
      %s14 = sshll.u32 [#allocation2], 4
      %s15 = int_to_ptr.vmem [resolvable:$true] %s14
      %20 = dma.hbm_to_vmem [thread:$0]  %s0, 4096, %s15, [#allocation3], 512, 512, 32
    $region5: #{tpu_custom_call.1} parent=1 // pred_fallthru
      _
    // Predicated region
    $region6: #{tpu_custom_call.1} parent=1 // pred_check
      _
    $region7: #{tpu_custom_call.1} parent=1 // pred_check_branch
      %22 = sbr.rel (0) target = $region9
    $region8: #{tpu_custom_call.1} parent=1 // pred_region
      %s24 = ssub.s32 4096, 4096
      %25 = vsyncadd [#allocation5], %s24
      %s26 = sshll.u32 [#allocation4], 4
      %s27 = int_to_ptr.vmem [resolvable:$true] %s26
      %32 = dma.hbm_to_vmem [thread:$0]  %s1, 4096, %s27, [#allocation5], 512, 512, 32
    $region9: #{tpu_custom_call.1} parent=1 // pred_fallthru
      _
    // Predicated region
    $region10: #{tpu_custom_call.1} parent=1 // pred_check
      _
    $region11: #{tpu_custom_call.1} parent=1 // pred_check_branch
      %34 = sbr.rel (0) target = $region13
    $region12: #{tpu_custom_call.1} parent=1 // pred_region
      %35 = dma.done [#allocation3], 4096
    $region13: #{tpu_custom_call.1} parent=1 // pred_fallthru
      _
    // Predicated region
    $region14: #{tpu_custom_call.1} parent=1 // pred_check
      _
    $region15: #{tpu_custom_call.1} parent=1 // pred_check_branch
      %37 = sbr.rel (0) target = $region17
    $region16: #{tpu_custom_call.1} parent=1 // pred_region
      %38 = dma.done [#allocation5], 4096
    $region17: #{tpu_custom_call.1} parent=1 // pred_fallthru
      _
    %v39 = vld [vmem:[#allocation2] sm:$0xff]
    %v40 = vld [vmem:[#allocation2 + $0x8] sm:$0xff]
    %v41 = vld [vmem:[#allocation2 + $0x10] sm:$0xff]
    %v42 = vld [vmem:[#allocation2 + $0x18] sm:$0xff]
    %v43 = vld [vmem:[#allocation2 + $0x20] sm:$0xff]
    %v44 = vld [vmem:[#allocation2 + $0x28] sm:$0xff]
    %v45 = vld [vmem:[#allocation2 + $0x30] sm:$0xff]
    %v46 = vld [vmem:[#allocation2 + $0x38] sm:$0xff]
    %v47 = vld [vmem:[#allocation2 + $0x40] sm:$0xff]
    %v48 = vld [vmem:[#allocation2 + $0x48] sm:$0xff]
    %v49 = vld [vmem:[#allocation2 + $0x50] sm:$0xff]
    %v50 = vld [vmem:[#allocation2 + $0x58] sm:$0xff]
    %v51 = vld [vmem:[#allocation2 + $0x60] sm:$0xff]
    %v52 = vld [vmem:[#allocation2 + $0x68] sm:$0xff]
    %v53 = vld [vmem:[#allocation2 + $0x70] sm:$0xff]
    %v54 = vld [vmem:[#allocation2 + $0x78] sm:$0xff]
    %v55 = vld [vmem:[#allocation2 + $0x80] sm:$0xff]
    %v56 = vld [vmem:[#allocation2 + $0x88] sm:$0xff]
    %v57 = vld [vmem:[#allocation2 + $0x90] sm:$0xff]
    %v58 = vld [vmem:[#allocation2 + $0x98] sm:$0xff]
    %v59 = vld [vmem:[#allocation2 + $0xa0] sm:$0xff]
    %v60 = vld [vmem:[#allocation2 + $0xa8] sm:$0xff]
    %v61 = vld [vmem:[#allocation2 + $0xb0] sm:$0xff]
    %v62 = vld [vmem:[#allocation2 + $0xb8] sm:$0xff]
    %v63 = vld [vmem:[#allocation2 + $0xc0] sm:$0xff]
    %v64 = vld [vmem:[#allocation2 + $0xc8] sm:$0xff]
    %v65 = vld [vmem:[#allocation2 + $0xd0] sm:$0xff]
    %v66 = vld [vmem:[#allocation2 + $0xd8] sm:$0xff]
    %v67 = vld [vmem:[#allocation2 + $0xe0] sm:$0xff]
    %v68 = vld [vmem:[#allocation2 + $0xe8] sm:$0xff]
    %v69 = vld [vmem:[#allocation2 + $0xf0] sm:$0xff]
    %v70 = vld [vmem:[#allocation2 + $0xf8] sm:$0xff]
    %v71 = vmul.f32 %v39, 10.0
    %v72 = vmul.f32 %v40, 10.0
    %v73 = vmul.f32 %v41, 10.0
    %v74 = vmul.f32 %v42, 10.0
    %v75 = vmul.f32 %v43, 10.0
    %v76 = vmul.f32 %v44, 10.0
    %v77 = vmul.f32 %v45, 10.0
    %v78 = vmul.f32 %v46, 10.0
    %v79 = vmul.f32 %v47, 10.0
    %v80 = vmul.f32 %v48, 10.0
    %v81 = vmul.f32 %v49, 10.0
    %v82 = vmul.f32 %v50, 10.0
    %v83 = vmul.f32 %v51, 10.0
    %v84 = vmul.f32 %v52, 10.0
    %v85 = vmul.f32 %v53, 10.0
    %v86 = vmul.f32 %v54, 10.0
    %v87 = vmul.f32 %v55, 10.0
    %v88 = vmul.f32 %v56, 10.0
    %v89 = vmul.f32 %v57, 10.0
    %v90 = vmul.f32 %v58, 10.0
    %v91 = vmul.f32 %v59, 10.0
    %v92 = vmul.f32 %v60, 10.0
    %v93 = vmul.f32 %v61, 10.0
    %v94 = vmul.f32 %v62, 10.0
    %v95 = vmul.f32 %v63, 10.0
    %v96 = vmul.f32 %v64, 10.0
    %v97 = vmul.f32 %v65, 10.0
    %v98 = vmul.f32 %v66, 10.0
    %v99 = vmul.f32 %v67, 10.0
    %v100 = vmul.f32 %v68, 10.0
    %v101 = vmul.f32 %v69, 10.0
    %v102 = vmul.f32 %v70, 10.0
    %v103 = vld [vmem:[#allocation4] sm:$0xff]
    %v104 = vld [vmem:[#allocation4 + $0x8] sm:$0xff]
    %v105 = vld [vmem:[#allocation4 + $0x10] sm:$0xff]
    %v106 = vld [vmem:[#allocation4 + $0x18] sm:$0xff]
    %v107 = vld [vmem:[#allocation4 + $0x20] sm:$0xff]
    %v108 = vld [vmem:[#allocation4 + $0x28] sm:$0xff]
    %v109 = vld [vmem:[#allocation4 + $0x30] sm:$0xff]
    %v110 = vld [vmem:[#allocation4 + $0x38] sm:$0xff]
    %v111 = vld [vmem:[#allocation4 + $0x40] sm:$0xff]
    %v112 = vld [vmem:[#allocation4 + $0x48] sm:$0xff]
    %v113 = vld [vmem:[#allocation4 + $0x50] sm:$0xff]
    %v114 = vld [vmem:[#allocation4 + $0x58] sm:$0xff]
    %v115 = vld [vmem:[#allocation4 + $0x60] sm:$0xff]
    %v116 = vld [vmem:[#allocation4 + $0x68] sm:$0xff]
    %v117 = vld [vmem:[#allocation4 + $0x70] sm:$0xff]
    %v118 = vld [vmem:[#allocation4 + $0x78] sm:$0xff]
    %v119 = vld [vmem:[#allocation4 + $0x80] sm:$0xff]
    %v120 = vld [vmem:[#allocation4 + $0x88] sm:$0xff]
    %v121 = vld [vmem:[#allocation4 + $0x90] sm:$0xff]
    %v122 = vld [vmem:[#allocation4 + $0x98] sm:$0xff]
    %v123 = vld [vmem:[#allocation4 + $0xa0] sm:$0xff]
    %v124 = vld [vmem:[#allocation4 + $0xa8] sm:$0xff]
    %v125 = vld [vmem:[#allocation4 + $0xb0] sm:$0xff]
    %v126 = vld [vmem:[#allocation4 + $0xb8] sm:$0xff]
    %v127 = vld [vmem:[#allocation4 + $0xc0] sm:$0xff]
    %v128 = vld [vmem:[#allocation4 + $0xc8] sm:$0xff]
    %v129 = vld [vmem:[#allocation4 + $0xd0] sm:$0xff]
    %v130 = vld [vmem:[#allocation4 + $0xd8] sm:$0xff]
    %v131 = vld [vmem:[#allocation4 + $0xe0] sm:$0xff]
    %v132 = vld [vmem:[#allocation4 + $0xe8] sm:$0xff]
    %v133 = vld [vmem:[#allocation4 + $0xf0] sm:$0xff]
    %v134 = vld [vmem:[#allocation4 + $0xf8] sm:$0xff]
    %v135 = vmul.f32 %v103, 14.285714
    %v136 = vmul.f32 %v104, 14.285714
    %v137 = vmul.f32 %v105, 14.285714
    %v138 = vmul.f32 %v106, 14.285714
    %v139 = vmul.f32 %v107, 14.285714
    %v140 = vmul.f32 %v108, 14.285714
    %v141 = vmul.f32 %v109, 14.285714
    %v142 = vmul.f32 %v110, 14.285714
    %v143 = vmul.f32 %v111, 14.285714
    %v144 = vmul.f32 %v112, 14.285714
    %v145 = vmul.f32 %v113, 14.285714
    %v146 = vmul.f32 %v114, 14.285714
    %v147 = vmul.f32 %v115, 14.285714
    %v148 = vmul.f32 %v116, 14.285714
    %v149 = vmul.f32 %v117, 14.285714
    %v150 = vmul.f32 %v118, 14.285714
    %v151 = vmul.f32 %v119, 14.285714
    %v152 = vmul.f32 %v120, 14.285714
    %v153 = vmul.f32 %v121, 14.285714
    %v154 = vmul.f32 %v122, 14.285714
    %v155 = vmul.f32 %v123, 14.285714
    %v156 = vmul.f32 %v124, 14.285714
    %v157 = vmul.f32 %v125, 14.285714
    %v158 = vmul.f32 %v126, 14.285714
    %v159 = vmul.f32 %v127, 14.285714
    %v160 = vmul.f32 %v128, 14.285714
    %v161 = vmul.f32 %v129, 14.285714
    %v162 = vmul.f32 %v130, 14.285714
    %v163 = vmul.f32 %v131, 14.285714
    %v164 = vmul.f32 %v132, 14.285714
    %v165 = vmul.f32 %v133, 14.285714
    %v166 = vmul.f32 %v134, 14.285714
    %v167 = vmax.f32 %v135, %v136
    %v168 = vmax.f32 %v167, %v137
    %v169 = vmax.f32 %v168, %v138
    %170 = vmax.xlane.f32.xlu0 %v169
    %v171 = vpop.xlane.xlu0 %170
    %v172 = vmax.f32 %v139, %v140
    %v173 = vmax.f32 %v172, %v141
    %v174 = vmax.f32 %v173, %v142
    %175 = vmax.xlane.f32.xlu0 %v174
    %v176 = vpop.xlane.xlu0 %175
    %v177 = vmax.f32 %v143, %v144
    %v178 = vmax.f32 %v177, %v145
    %v179 = vmax.f32 %v178, %v146
    %180 = vmax.xlane.f32.xlu0 %v179
    %v181 = vpop.xlane.xlu0 %180
    %v182 = vmax.f32 %v147, %v148
    %v183 = vmax.f32 %v182, %v149
    %v184 = vmax.f32 %v183, %v150
    %185 = vmax.xlane.f32.xlu0 %v184
    %v186 = vpop.xlane.xlu0 %185
    %v187 = vmax.f32 %v151, %v152
    %v188 = vmax.f32 %v187, %v153
    %v189 = vmax.f32 %v188, %v154
    %190 = vmax.xlane.f32.xlu0 %v189
    %v191 = vpop.xlane.xlu0 %190
    %v192 = vmax.f32 %v155, %v156
    %v193 = vmax.f32 %v192, %v157
    %v194 = vmax.f32 %v193, %v158
    %195 = vmax.xlane.f32.xlu0 %v194
    %v196 = vpop.xlane.xlu0 %195
    %v197 = vmax.f32 %v159, %v160
    %v198 = vmax.f32 %v197, %v161
    %v199 = vmax.f32 %v198, %v162
    %200 = vmax.xlane.f32.xlu0 %v199
    %v201 = vpop.xlane.xlu0 %200
    %v202 = vmax.f32 %v163, %v164
    %v203 = vmax.f32 %v202, %v165
    %v204 = vmax.f32 %v203, %v166
    %205 = vmax.xlane.f32.xlu0 %v204
    %v206 = vpop.xlane.xlu0 %205
    %v207 = vsub.f32 %v135, %v171
    %v208 = vsub.f32 %v136, %v171
    %v209 = vsub.f32 %v137, %v171
    %v210 = vsub.f32 %v138, %v171
    %v211 = vsub.f32 %v139, %v176
    %v212 = vsub.f32 %v140, %v176
    %v213 = vsub.f32 %v141, %v176
    %v214 = vsub.f32 %v142, %v176
    %v215 = vsub.f32 %v143, %v181
    %v216 = vsub.f32 %v144, %v181
    %v217 = vsub.f32 %v145, %v181
    %v218 = vsub.f32 %v146, %v181
    %v219 = vsub.f32 %v147, %v186
    %v220 = vsub.f32 %v148, %v186
    %v221 = vsub.f32 %v149, %v186
    %v222 = vsub.f32 %v150, %v186
    %v223 = vsub.f32 %v151, %v191
    %v224 = vsub.f32 %v152, %v191
    %v225 = vsub.f32 %v153, %v191
    %v226 = vsub.f32 %v154, %v191
    %v227 = vsub.f32 %v155, %v196
    %v228 = vsub.f32 %v156, %v196
    %v229 = vsub.f32 %v157, %v196
    %v230 = vsub.f32 %v158, %v196
    %v231 = vsub.f32 %v159, %v201
    %v232 = vsub.f32 %v160, %v201
    %v233 = vsub.f32 %v161, %v201
    %v234 = vsub.f32 %v162, %v201
    %v235 = vsub.f32 %v163, %v206
    %v236 = vsub.f32 %v164, %v206
    %v237 = vsub.f32 %v165, %v206
    %v238 = vsub.f32 %v166, %v206
    %v239 = vmul.f32 %v207, 1.442695
    %v240 = vpow.pop %v239
    %v241 = vmul.f32 %v208, 1.442695
    %v242 = vpow.pop %v241
    %v243 = vmul.f32 %v209, 1.442695
    %v244 = vpow.pop %v243
    %v245 = vmul.f32 %v210, 1.442695
    %v246 = vpow.pop %v245
    %v247 = vmul.f32 %v211, 1.442695
    %v248 = vpow.pop %v247
    %v249 = vmul.f32 %v212, 1.442695
    %v250 = vpow.pop %v249
    %v251 = vmul.f32 %v213, 1.442695
    %v252 = vpow.pop %v251
    %v253 = vmul.f32 %v214, 1.442695
    %v254 = vpow.pop %v253
    %v255 = vmul.f32 %v215, 1.442695
    %v256 = vpow.pop %v255
    %v257 = vmul.f32 %v216, 1.442695
    %v258 = vpow.pop %v257
    %v259 = vmul.f32 %v217, 1.442695
    %v260 = vpow.pop %v259
    %v261 = vmul.f32 %v218, 1.442695
    %v262 = vpow.pop %v261
    %v263 = vmul.f32 %v219, 1.442695
    %v264 = vpow.pop %v263
    %v265 = vmul.f32 %v220, 1.442695
    %v266 = vpow.pop %v265
    %v267 = vmul.f32 %v221, 1.442695
    %v268 = vpow.pop %v267
    %v269 = vmul.f32 %v222, 1.442695
    %v270 = vpow.pop %v269
    %v271 = vmul.f32 %v223, 1.442695
    %v272 = vpow.pop %v271
    %v273 = vmul.f32 %v224, 1.442695
    %v274 = vpow.pop %v273
    %v275 = vmul.f32 %v225, 1.442695
    %v276 = vpow.pop %v275
    %v277 = vmul.f32 %v226, 1.442695
    %v278 = vpow.pop %v277
    %v279 = vmul.f32 %v227, 1.442695
    %v280 = vpow.pop %v279
    %v281 = vmul.f32 %v228, 1.442695
    %v282 = vpow.pop %v281
    %v283 = vmul.f32 %v229, 1.442695
    %v284 = vpow.pop %v283
    %v285 = vmul.f32 %v230, 1.442695
    %v286 = vpow.pop %v285
    %v287 = vmul.f32 %v231, 1.442695
    %v288 = vpow.pop %v287
    %v289 = vmul.f32 %v232, 1.442695
    %v290 = vpow.pop %v289
    %v291 = vmul.f32 %v233, 1.442695
    %v292 = vpow.pop %v291
    %v293 = vmul.f32 %v234, 1.442695
    %v294 = vpow.pop %v293
    %v295 = vmul.f32 %v235, 1.442695
    %v296 = vpow.pop %v295
    %v297 = vmul.f32 %v236, 1.442695
    %v298 = vpow.pop %v297
    %v299 = vmul.f32 %v237, 1.442695
    %v300 = vpow.pop %v299
    %v301 = vmul.f32 %v238, 1.442695
    %v302 = vpow.pop %v301
    %v303 = vadd.f32 %v240, %v242
    %v304 = vadd.f32 %v303, %v244
    %v305 = vadd.f32 %v304, %v246
    %306 = vadd.xlane.f32.xlu0 %v305
    %v307 = vpop.xlane.xlu0 %306
    %v308 = vadd.f32 %v248, %v250
    %v309 = vadd.f32 %v308, %v252
    %v310 = vadd.f32 %v309, %v254
    %311 = vadd.xlane.f32.xlu0 %v310
    %v312 = vpop.xlane.xlu0 %311
    %v313 = vadd.f32 %v256, %v258
    %v314 = vadd.f32 %v313, %v260
    %v315 = vadd.f32 %v314, %v262
    %316 = vadd.xlane.f32.xlu0 %v315
    %v317 = vpop.xlane.xlu0 %316
    %v318 = vadd.f32 %v264, %v266
    %v319 = vadd.f32 %v318, %v268
    %v320 = vadd.f32 %v319, %v270
    %321 = vadd.xlane.f32.xlu0 %v320
    %v322 = vpop.xlane.xlu0 %321
    %v323 = vadd.f32 %v272, %v274
    %v324 = vadd.f32 %v323, %v276
    %v325 = vadd.f32 %v324, %v278
    %326 = vadd.xlane.f32.xlu0 %v325
    %v327 = vpop.xlane.xlu0 %326
    %v328 = vadd.f32 %v280, %v282
    %v329 = vadd.f32 %v328, %v284
    %v330 = vadd.f32 %v329, %v286
    %331 = vadd.xlane.f32.xlu0 %v330
    %v332 = vpop.xlane.xlu0 %331
    %v333 = vadd.f32 %v288, %v290
    %v334 = vadd.f32 %v333, %v292
    %v335 = vadd.f32 %v334, %v294
    %336 = vadd.xlane.f32.xlu0 %v335
    %v337 = vpop.xlane.xlu0 %336
    %v338 = vadd.f32 %v296, %v298
    %v339 = vadd.f32 %v338, %v300
    %v340 = vadd.f32 %v339, %v302
    %341 = vadd.xlane.f32.xlu0 %v340
    %v342 = vpop.xlane.xlu0 %341
    %v343 = vmax.f32 %v71, %v72
    %v344 = vmax.f32 %v343, %v73
    %v345 = vmax.f32 %v344, %v74
    %346 = vmax.xlane.f32.xlu0 %v345
    %v347 = vpop.xlane.xlu0 %346
    %v348 = vmax.f32 %v75, %v76
    %v349 = vmax.f32 %v348, %v77
    %v350 = vmax.f32 %v349, %v78
    %351 = vmax.xlane.f32.xlu0 %v350
    %v352 = vpop.xlane.xlu0 %351
    %v353 = vmax.f32 %v79, %v80
    %v354 = vmax.f32 %v353, %v81
    %v355 = vmax.f32 %v354, %v82
    %356 = vmax.xlane.f32.xlu0 %v355
    %v357 = vpop.xlane.xlu0 %356
    %v358 = vmax.f32 %v83, %v84
    %v359 = vmax.f32 %v358, %v85
    %v360 = vmax.f32 %v359, %v86
    %361 = vmax.xlane.f32.xlu0 %v360
    %v362 = vpop.xlane.xlu0 %361
    %v363 = vmax.f32 %v87, %v88
    %v364 = vmax.f32 %v363, %v89
    %v365 = vmax.f32 %v364, %v90
    %366 = vmax.xlane.f32.xlu0 %v365
    %v367 = vpop.xlane.xlu0 %366
    %v368 = vmax.f32 %v91, %v92
    %v369 = vmax.f32 %v368, %v93
    %v370 = vmax.f32 %v369, %v94
    %371 = vmax.xlane.f32.xlu0 %v370
    %v372 = vpop.xlane.xlu0 %371
    %v373 = vmax.f32 %v95, %v96
    %v374 = vmax.f32 %v373, %v97
    %v375 = vmax.f32 %v374, %v98
    %376 = vmax.xlane.f32.xlu0 %v375
    %v377 = vpop.xlane.xlu0 %376
    %v378 = vmax.f32 %v99, %v100
    %v379 = vmax.f32 %v378, %v101
    %v380 = vmax.f32 %v379, %v102
    %381 = vmax.xlane.f32.xlu0 %v380
    %v382 = vpop.xlane.xlu0 %381
    %v383 = vsub.f32 %v71, %v347
    %v384 = vsub.f32 %v72, %v347
    %v385 = vsub.f32 %v73, %v347
    %v386 = vsub.f32 %v74, %v347
    %v387 = vsub.f32 %v75, %v352
    %v388 = vsub.f32 %v76, %v352
    %v389 = vsub.f32 %v77, %v352
    %v390 = vsub.f32 %v78, %v352
    %v391 = vsub.f32 %v79, %v357
    %v392 = vsub.f32 %v80, %v357
    %v393 = vsub.f32 %v81, %v357
    %v394 = vsub.f32 %v82, %v357
    %v395 = vsub.f32 %v83, %v362
    %v396 = vsub.f32 %v84, %v362
    %v397 = vsub.f32 %v85, %v362
    %v398 = vsub.f32 %v86, %v362
    %v399 = vsub.f32 %v87, %v367
    %v400 = vsub.f32 %v88, %v367
    %v401 = vsub.f32 %v89, %v367
    %v402 = vsub.f32 %v90, %v367
    %v403 = vsub.f32 %v91, %v372
    %v404 = vsub.f32 %v92, %v372
    %v405 = vsub.f32 %v93, %v372
    %v406 = vsub.f32 %v94, %v372
    %v407 = vsub.f32 %v95, %v377
    %v408 = vsub.f32 %v96, %v377
    %v409 = vsub.f32 %v97, %v377
    %v410 = vsub.f32 %v98, %v377
    %v411 = vsub.f32 %v99, %v382
    %v412 = vsub.f32 %v100, %v382
    %v413 = vsub.f32 %v101, %v382
    %v414 = vsub.f32 %v102, %v382
    %v415 = vmul.f32 %v383, 1.442695
    %v416 = vpow.pop %v415
    %v417 = vmul.f32 %v384, 1.442695
    %v418 = vpow.pop %v417
    %v419 = vmul.f32 %v385, 1.442695
    %v420 = vpow.pop %v419
    %v421 = vmul.f32 %v386, 1.442695
    %v422 = vpow.pop %v421
    %v423 = vmul.f32 %v387, 1.442695
    %v424 = vpow.pop %v423
    %v425 = vmul.f32 %v388, 1.442695
    %v426 = vpow.pop %v425
    %v427 = vmul.f32 %v389, 1.442695
    %v428 = vpow.pop %v427
    %v429 = vmul.f32 %v390, 1.442695
    %v430 = vpow.pop %v429
    %v431 = vmul.f32 %v391, 1.442695
    %v432 = vpow.pop %v431
    %v433 = vmul.f32 %v392, 1.442695
    %v434 = vpow.pop %v433
    %v435 = vmul.f32 %v393, 1.442695
    %v436 = vpow.pop %v435
    %v437 = vmul.f32 %v394, 1.442695
    %v438 = vpow.pop %v437
    %v439 = vmul.f32 %v395, 1.442695
    %v440 = vpow.pop %v439
    %v441 = vmul.f32 %v396, 1.442695
    %v442 = vpow.pop %v441
    %v443 = vmul.f32 %v397, 1.442695
    %v444 = vpow.pop %v443
    %v445 = vmul.f32 %v398, 1.442695
    %v446 = vpow.pop %v445
    %v447 = vmul.f32 %v399, 1.442695
    %v448 = vpow.pop %v447
    %v449 = vmul.f32 %v400, 1.442695
    %v450 = vpow.pop %v449
    %v451 = vmul.f32 %v401, 1.442695
    %v452 = vpow.pop %v451
    %v453 = vmul.f32 %v402, 1.442695
    %v454 = vpow.pop %v453
    %v455 = vmul.f32 %v403, 1.442695
    %v456 = vpow.pop %v455
    %v457 = vmul.f32 %v404, 1.442695
    %v458 = vpow.pop %v457
    %v459 = vmul.f32 %v405, 1.442695
    %v460 = vpow.pop %v459
    %v461 = vmul.f32 %v406, 1.442695
    %v462 = vpow.pop %v461
    %v463 = vmul.f32 %v407, 1.442695
    %v464 = vpow.pop %v463
    %v465 = vmul.f32 %v408, 1.442695
    %v466 = vpow.pop %v465
    %v467 = vmul.f32 %v409, 1.442695
    %v468 = vpow.pop %v467
    %v469 = vmul.f32 %v410, 1.442695
    %v470 = vpow.pop %v469
    %v471 = vmul.f32 %v411, 1.442695
    %v472 = vpow.pop %v471
    %v473 = vmul.f32 %v412, 1.442695
    %v474 = vpow.pop %v473
    %v475 = vmul.f32 %v413, 1.442695
    %v476 = vpow.pop %v475
    %v477 = vmul.f32 %v414, 1.442695
    %v478 = vpow.pop %v477
    %v479 = vadd.f32 %v416, %v418
    %v480 = vadd.f32 %v479, %v420
    %v481 = vadd.f32 %v480, %v422
    %482 = vadd.xlane.f32.xlu0 %v481
    %v483 = vpop.xlane.xlu0 %482
    %v484 = vadd.f32 %v424, %v426
    %v485 = vadd.f32 %v484, %v428
    %v486 = vadd.f32 %v485, %v430
    %487 = vadd.xlane.f32.xlu0 %v486
    %v488 = vpop.xlane.xlu0 %487
    %v489 = vadd.f32 %v432, %v434
    %v490 = vadd.f32 %v489, %v436
    %v491 = vadd.f32 %v490, %v438
    %492 = vadd.xlane.f32.xlu0 %v491
    %v493 = vpop.xlane.xlu0 %492
    %v494 = vadd.f32 %v440, %v442
    %v495 = vadd.f32 %v494, %v444
    %v496 = vadd.f32 %v495, %v446
    %497 = vadd.xlane.f32.xlu0 %v496
    %v498 = vpop.xlane.xlu0 %497
    %v499 = vadd.f32 %v448, %v450
    %v500 = vadd.f32 %v499, %v452
    %v501 = vadd.f32 %v500, %v454
    %502 = vadd.xlane.f32.xlu0 %v501
    %v503 = vpop.xlane.xlu0 %502
    %v504 = vadd.f32 %v456, %v458
    %v505 = vadd.f32 %v504, %v460
    %v506 = vadd.f32 %v505, %v462
    %507 = vadd.xlane.f32.xlu0 %v506
    %v508 = vpop.xlane.xlu0 %507
    %v509 = vadd.f32 %v464, %v466
    %v510 = vadd.f32 %v509, %v468
    %v511 = vadd.f32 %v510, %v470
    %512 = vadd.xlane.f32.xlu0 %v511
    %v513 = vpop.xlane.xlu0 %512
    %v514 = vadd.f32 %v472, %v474
    %v515 = vadd.f32 %v514, %v476
    %v516 = vadd.f32 %v515, %v478
    %517 = vadd.xlane.f32.xlu0 %v516
    %v518 = vpop.xlane.xlu0 %517
    %v519 = vlog2.pop %v483
    %v520 = vmul.f32 %v519, 0.6931472
    %v521 = vlog2.pop %v488
    %v522 = vmul.f32 %v521, 0.6931472
    %v523 = vlog2.pop %v493
    %v524 = vmul.f32 %v523, 0.6931472
    %v525 = vlog2.pop %v498
    %v526 = vmul.f32 %v525, 0.6931472
    %v527 = vlog2.pop %v503
    %v528 = vmul.f32 %v527, 0.6931472
    %v529 = vlog2.pop %v508
    %v530 = vmul.f32 %v529, 0.6931472
    %v531 = vlog2.pop %v513
    %v532 = vmul.f32 %v531, 0.6931472
    %v533 = vlog2.pop %v518
    %v534 = vmul.f32 %v533, 0.6931472
    %v535 = vmul.f32 %v240, %v383
    %v536 = vmul.f32 %v242, %v384
    %v537 = vmul.f32 %v244, %v385
    %v538 = vmul.f32 %v246, %v386
    %v539 = vmul.f32 %v248, %v387
    %v540 = vmul.f32 %v250, %v388
    %v541 = vmul.f32 %v252, %v389
    %v542 = vmul.f32 %v254, %v390
    %v543 = vmul.f32 %v256, %v391
    %v544 = vmul.f32 %v258, %v392
    %v545 = vmul.f32 %v260, %v393
    %v546 = vmul.f32 %v262, %v394
    %v547 = vmul.f32 %v264, %v395
    %v548 = vmul.f32 %v266, %v396
    %v549 = vmul.f32 %v268, %v397
    %v550 = vmul.f32 %v270, %v398
    %v551 = vmul.f32 %v272, %v399
    %v552 = vmul.f32 %v274, %v400
    %v553 = vmul.f32 %v276, %v401
    %v554 = vmul.f32 %v278, %v402
    %v555 = vmul.f32 %v280, %v403
    %v556 = vmul.f32 %v282, %v404
    %v557 = vmul.f32 %v284, %v405
    %v558 = vmul.f32 %v286, %v406
    %v559 = vmul.f32 %v288, %v407
    %v560 = vmul.f32 %v290, %v408
    %v561 = vmul.f32 %v292, %v409
    %v562 = vmul.f32 %v294, %v410
    %v563 = vmul.f32 %v296, %v411
    %v564 = vmul.f32 %v298, %v412
    %v565 = vmul.f32 %v300, %v413
    %v566 = vmul.f32 %v302, %v414
    %v567 = vadd.f32 %v535, %v536
    %v568 = vadd.f32 %v567, %v537
    %v569 = vadd.f32 %v568, %v538
    %570 = vadd.xlane.f32.xlu0 %v569
    %v571 = vpop.xlane.xlu0 %570
    %v572 = vadd.f32 %v539, %v540
    %v573 = vadd.f32 %v572, %v541
    %v574 = vadd.f32 %v573, %v542
    %575 = vadd.xlane.f32.xlu0 %v574
    %v576 = vpop.xlane.xlu0 %575
    %v577 = vadd.f32 %v543, %v544
    %v578 = vadd.f32 %v577, %v545
    %v579 = vadd.f32 %v578, %v546
    %580 = vadd.xlane.f32.xlu0 %v579
    %v581 = vpop.xlane.xlu0 %580
    %v582 = vadd.f32 %v547, %v548
    %v583 = vadd.f32 %v582, %v549
    %v584 = vadd.f32 %v583, %v550
    %585 = vadd.xlane.f32.xlu0 %v584
    %v586 = vpop.xlane.xlu0 %585
    %v587 = vadd.f32 %v551, %v552
    %v588 = vadd.f32 %v587, %v553
    %v589 = vadd.f32 %v588, %v554
    %590 = vadd.xlane.f32.xlu0 %v589
    %v591 = vpop.xlane.xlu0 %590
    %v592 = vadd.f32 %v555, %v556
    %v593 = vadd.f32 %v592, %v557
    %v594 = vadd.f32 %v593, %v558
    %595 = vadd.xlane.f32.xlu0 %v594
    %v596 = vpop.xlane.xlu0 %595
    %v597 = vadd.f32 %v559, %v560
    %v598 = vadd.f32 %v597, %v561
    %v599 = vadd.f32 %v598, %v562
    %600 = vadd.xlane.f32.xlu0 %v599
    %v601 = vpop.xlane.xlu0 %600
    %v602 = vadd.f32 %v563, %v564
    %v603 = vadd.f32 %v602, %v565
    %v604 = vadd.f32 %v603, %v566
    %605 = vadd.xlane.f32.xlu0 %v604
    %v606 = vpop.xlane.xlu0 %605
    %v607 = vrcp.pop %v307
    %v608 = vrcp.pop %v312
    %v609 = vrcp.pop %v317
    %v610 = vrcp.pop %v322
    %v611 = vrcp.pop %v327
    %v612 = vrcp.pop %v332
    %v613 = vrcp.pop %v337
    %v614 = vrcp.pop %v342
    %v615 = vmul.f32 %v571, %v607
    %v616 = vmul.f32 %v576, %v608
    %v617 = vmul.f32 %v581, %v609
    %v618 = vmul.f32 %v586, %v610
    %v619 = vmul.f32 %v591, %v611
    %v620 = vmul.f32 %v596, %v612
    %v621 = vmul.f32 %v601, %v613
    %v622 = vmul.f32 %v606, %v614
    %v623 = vsub.f32 %v520, %v615
    %v624 = vsub.f32 %v522, %v616
    %v625 = vsub.f32 %v524, %v617
    %v626 = vsub.f32 %v526, %v618
    %v627 = vsub.f32 %v528, %v619
    %v628 = vsub.f32 %v530, %v620
    %v629 = vsub.f32 %v532, %v621
    %v630 = vsub.f32 %v534, %v622
    %vm631 = vcmask 7168
    %632 = vst.msk [vmem:[%s2] sm:$0xff] %vm631, %v623
    %633 = vst.msk [vmem:[%s2 + $0x8] sm:$0xff] %vm631, %v624
    %634 = vst.msk [vmem:[%s2 + $0x10] sm:$0xff] %vm631, %v625
    %635 = vst.msk [vmem:[%s2 + $0x18] sm:$0xff] %vm631, %v626
    %636 = vst.msk [vmem:[%s2 + $0x20] sm:$0xff] %vm631, %v627
    %637 = vst.msk [vmem:[%s2 + $0x28] sm:$0xff] %vm631, %v628
    %638 = vst.msk [vmem:[%s2 + $0x30] sm:$0xff] %vm631, %v629
    %639 = vst.msk [vmem:[%s2 + $0x38] sm:$0xff] %vm631, %v630
    // Predicated region
    $region18: #{tpu_custom_call.1} parent=1 // pred_check
      _
    $region19: #{tpu_custom_call.1} parent=1 // pred_check_branch
      %641 = sbr.rel (0) target = $region21
    $region20: #{tpu_custom_call.1} parent=1 // pred_region
      _
    $region21: #{tpu_custom_call.1} parent=1 // pred_fallthru
      _
    // Predicated region
    $region22: #{tpu_custom_call.1} parent=1 // pred_check
      _
    $region23: #{tpu_custom_call.1} parent=1 // pred_check_branch
      %643 = sbr.rel (0) target = $region25
    $region24: #{tpu_custom_call.1} parent=1 // pred_region
      _
    $region25: #{tpu_custom_call.1} parent=1 // pred_fallthru
      _
    %644 = vsyncpa [#allocation3], 1
    %645 = vsyncpa [#allocation5], 1

</llo_original>
